<compile_context>
chip_gen: v7x
topology: tpu7x:2x2x1
jax: 0.10.0
libtpu: 0.0.40
codegen_flags: <defaults>
</compile_context>

<pallas_src>
import functools

import jax
import jax.numpy as jnp
import numpy as np
from jax.experimental import pallas as pl
from jax.experimental.pallas import tpu as pltpu


# ----------------------------- fused Pallas kernel ----------------------------- #

def _gcn_fused_kernel(adj_ref, adjl_ref, x_ref, idx_ref,
                      wg1_ref, bg1_ref, wl1_ref, bl1_ref,
                      wg2_ref, bg2_ref, wl2_ref, bl2_ref,
                      wfc_ref, bfc_ref,
                      x1_ref, out_ref, *, n_x, lambda1):
    adj = adj_ref[...]        # (N, N)
    adjl = adjl_ref[...]      # (N, N)
    x = x_ref[...]            # (n_x, nhid)

    # ---- layer 1 (feature_less): relu(adj @ cat([x, W], 0) + b) -------------
    # Split the matmul instead of materialising the concatenation:
    #   adj @ cat([x, W], 0) == adj[:, :n_x] @ x + adj[:, n_x:] @ W
    x1 = (jnp.dot(adj[:, :n_x], x, preferred_element_type=jnp.float32)
          + jnp.dot(adj[:, n_x:], wg1_ref[...], preferred_element_type=jnp.float32)
          + bg1_ref[...])
    x1 = jnp.maximum(x1, 0.0)

    x1_lab = (jnp.dot(adjl[:, :n_x], x, preferred_element_type=jnp.float32)
              + jnp.dot(adjl[:, n_x:], wl1_ref[...], preferred_element_type=jnp.float32)
              + bl1_ref[...])
    x1_lab = jnp.maximum(x1_lab, 0.0)

    # ---- layer 2 (no activation): adj @ (x1 @ W2) + b ------------------------
    x2 = jnp.dot(adj,
                 jnp.dot(x1, wg2_ref[...], preferred_element_type=jnp.float32),
                 preferred_element_type=jnp.float32) + bg2_ref[...]
    x2_lab = jnp.dot(adjl,
                     jnp.dot(x1_lab, wl2_ref[...], preferred_element_type=jnp.float32),
                     preferred_element_type=jnp.float32) + bl2_ref[...]

    # ---- row gather of the mixed features via ONE one-hot matmul (MXU) -------
    # x2[idx] + lambda1 * x2_lab[idx] == (x2 + lambda1 * x2_lab)[idx]
    mixed = x2 + lambda1 * x2_lab                                    # (N, nout2)
    idx = idx_ref[...]                                               # (Ksel, 1) int32
    cols = jax.lax.broadcasted_iota(jnp.int32, (idx.shape[0], adj.shape[0]), 1)
    sel = (cols == idx).astype(jnp.float32)                          # (Ksel, N)
    z = jnp.maximum(jnp.dot(sel, mixed, preferred_element_type=jnp.float32), 0.0)

    # ---- head: sigmoid(z @ W_fc^T + b_fc) ------------------------------------
    head = jnp.dot(z, wfc_ref[...], preferred_element_type=jnp.float32) + bfc_ref[...]

    # Only two stores leave the kernel.
    x1_ref[...] = x1
    out_ref[...] = jax.nn.sigmoid(head)


# ---------------------------------- wrapper ------------------------------------ #

def gcn_forward_fused(params, x, adj, adj_lab, idx, lambda1):
    """Mirrors GCN.forward (dropout p=0 is identity; returns (x1, x2))."""
    N = adj.shape[0]
    n_x, nhid = x.shape
    nout2 = params["w_gc2"].shape[1]
    nclass = params["w_fc_t"].shape[1]
    ksel = idx.shape[0]
    idx2d = idx.reshape(ksel, 1).astype(jnp.int32)

    inputs = (adj, adj_lab, x, idx2d,
              params["w_gc1"], params["b_gc1"],
              params["w_gclab1"], params["b_gclab1"],
              params["w_gc2"], params["b_gc2"],
              params["w_gclab2"], params["b_gclab2"],
              params["w_fc_t"], params["b_fc"])

    # Advisory cost hint so XLA schedules around this tiny custom call sensibly.
    flops = int(2 * (2 * N * N * nhid                           # layer-1 spmm (2 branches)
                     + 2 * (N * nhid * nout2 + N * N * nout2)   # layer-2 (2 branches)
                     + ksel * N * nout2                         # one-hot gather of mix
                     + ksel * nout2 * nclass))                  # fc head
    bytes_accessed = int(sum(int(np.prod(a.shape)) * 4 for a in inputs)
                         + (N * nhid + ksel * nclass) * 4)

    x1, out = pl.pallas_call(
        functools.partial(_gcn_fused_kernel, n_x=n_x, lambda1=float(lambda1)),
        out_shape=(jax.ShapeDtypeStruct((N, nhid), jnp.float32),
                   jax.ShapeDtypeStruct((ksel, nclass), jnp.float32)),
        in_specs=[pl.BlockSpec(memory_space=pltpu.MemorySpace.VMEM)
                  for _ in inputs],
        out_specs=(pl.BlockSpec(memory_space=pltpu.MemorySpace.VMEM),
                   pl.BlockSpec(memory_space=pltpu.MemorySpace.VMEM)),
        cost_estimate=pl.CostEstimate(flops=flops,
                                      transcendentals=int(ksel * nclass),
                                      bytes_accessed=bytes_accessed),
    )(*inputs)
    return x1, out


# ------------------------------- params & reference ---------------------------- #

def init_params(key, nfeat1, nfeat2, nhid, nclass):
    """Deterministic parameter init matching the module's shapes."""
    def gc_weight(k, fin, fout):
        stdv = float(np.sqrt(6.0 / (fin + fout)))
        return jax.random.uniform(k, (fin, fout), jnp.float32, -stdv, stdv)

    ks = jax.random.split(key, 6)
    nout2 = nclass * 3
    params = {
        # GraphConvolution weights: (in_features, out_features); biases zeros (1, out)
        "w_gc1": gc_weight(ks[0], nfeat1, nhid),
        "b_gc1": jnp.zeros((1, nhid), jnp.float32),
        "w_gclab1": gc_weight(ks[1], nfeat2, nhid),
        "b_gclab1": jnp.zeros((1, nhid), jnp.float32),
        "w_gc2": gc_weight(ks[2], nhid, nout2),
        "b_gc2": jnp.zeros((1, nout2), jnp.float32),
        "w_gclab2": gc_weight(ks[3], nhid, nout2),
        "b_gclab2": jnp.zeros((1, nout2), jnp.float32),
        # fc: nn.Linear(nclass*3, nclass) -> store transposed weight for x @ W^T
        "w_fc_t": jax.random.uniform(
            ks[4], (nout2, nclass), jnp.float32,
            -1.0 / np.sqrt(nout2), 1.0 / np.sqrt(nout2)),
        "b_fc": jax.random.uniform(
            ks[5], (1, nclass), jnp.float32,
            -1.0 / np.sqrt(nout2), 1.0 / np.sqrt(nout2)),
    }
    # TODO(synk): att1 / att2 Linear layers exist in __init__ but are unused in forward.
    return params


def gcn_reference(params, x, adj, adj_lab, idx, lambda1):
    """Pure-JAX reference of GCN.forward for correctness checking."""
    support1 = jnp.concatenate([x, params["w_gc1"]], axis=0)
    x1 = jax.nn.relu(adj @ support1 + params["b_gc1"])
    support1l = jnp.concatenate([x, params["w_gclab1"]], axis=0)
    x1_lab = jax.nn.relu(adj_lab @ support1l + params["b_gclab1"])
    x2 = adj @ (x1 @ params["w_gc2"]) + params["b_gc2"]
    x2_lab = adj_lab @ (x1_lab @ params["w_gclab2"]) + params["b_gclab2"]
    z = jax.nn.relu(x2[idx] + lambda1 * x2_lab[idx])
    out = jax.nn.sigmoid(z @ params["w_fc_t"] + params["b_fc"])
    return x1, out


# ------------------------------------- main ------------------------------------ #

if __name__ == "__main__":
    # Small, consistent shapes:
    #   feature_less GC requires x.shape[1] == nhid and adj square with
    #   N = x.shape[0] + nfeat (cat([x, W], 0) feeds adj @ support).
    nfeat1 = nfeat2 = 8
    nhid = 32
    nclass = 4
    n_x = 16
    N = n_x + nfeat1          # 24

    key = jax.random.PRNGKey(0)
    k_param, k_x, k_adj, k_adjl = jax.random.split(key, 4)

    params = init_params(k_param, nfeat1, nfeat2, nhid, nclass)

    x = jax.random.normal(k_x, (n_x, nhid), jnp.float32)
    adj = jax.random.uniform(k_adj, (N, N), jnp.float32)
    adj = adj / jnp.sum(adj, axis=1, keepdims=True)          # row-normalized dense adjacency
    adj_lab = jax.random.uniform(k_adjl, (N, N), jnp.float32)
    adj_lab = adj_lab / jnp.sum(adj_lab, axis=1, keepdims=True)
    idx = jnp.array([0, 3, 5, 7, 11, 13, 17, 23], dtype=jnp.int32)
    lambda1 = 0.5

    x1, x2 = gcn_forward_fused(params, x, adj, adj_lab, idx, lambda1)
    jax.block_until_ready((x1, x2))

    assert x1.shape == (N, nhid) and x2.shape == (idx.shape[0], nclass)

    # Correctness check against the pure-JAX reference.
    x1_ref, x2_ref = gcn_reference(params, x, adj, adj_lab, idx, lambda1)
    np.testing.assert_allclose(np.asarray(x1), np.asarray(x1_ref), rtol=1e-3, atol=1e-3)
    np.testing.assert_allclose(np.asarray(x2), np.asarray(x2_ref), rtol=1e-3, atol=1e-3)

    print("KERNEL_OK")
</pallas_src>

<mosaic_0001>
module attributes {stable_mosaic.version = 11 : i64} {
  func.func @_gcn_fused_kernel(%arg0: memref<24x24xf32, #tpu.memory_space<vmem>>, %arg1: memref<24x24xf32, #tpu.memory_space<vmem>>, %arg2: memref<16x32xf32, #tpu.memory_space<vmem>>, %arg3: memref<8x1xi32, #tpu.memory_space<vmem>>, %arg4: memref<8x32xf32, #tpu.memory_space<vmem>>, %arg5: memref<1x32xf32, #tpu.memory_space<vmem>>, %arg6: memref<8x32xf32, #tpu.memory_space<vmem>>, %arg7: memref<1x32xf32, #tpu.memory_space<vmem>>, %arg8: memref<32x12xf32, #tpu.memory_space<vmem>>, %arg9: memref<1x12xf32, #tpu.memory_space<vmem>>, %arg10: memref<32x12xf32, #tpu.memory_space<vmem>>, %arg11: memref<1x12xf32, #tpu.memory_space<vmem>>, %arg12: memref<12x4xf32, #tpu.memory_space<vmem>>, %arg13: memref<1x4xf32, #tpu.memory_space<vmem>>, %arg14: memref<24x32xf32, #tpu.memory_space<vmem>>, %arg15: memref<8x4xf32, #tpu.memory_space<vmem>>) attributes {dimension_semantics = [], scalar_prefetch = 0 : i64, scratch_operands = 0 : i64, tpu.core_type = #tpu.core_type<tc>} {
    %c0 = arith.constant 0 : index
    %c0_0 = arith.constant 0 : index
    %0 = vector.load %arg0[%c0, %c0_0] : memref<24x24xf32, #tpu.memory_space<vmem>>, vector<24x24xf32>
    %c0_1 = arith.constant 0 : index
    %c0_2 = arith.constant 0 : index
    %1 = vector.load %arg1[%c0_1, %c0_2] : memref<24x24xf32, #tpu.memory_space<vmem>>, vector<24x24xf32>
    %c0_3 = arith.constant 0 : index
    %c0_4 = arith.constant 0 : index
    %2 = vector.load %arg2[%c0_3, %c0_4] : memref<16x32xf32, #tpu.memory_space<vmem>>, vector<16x32xf32>
    %3 = vector.extract_strided_slice %0 {offsets = [0, 0], sizes = [24, 16], strides = [1, 1]} : vector<24x24xf32> to vector<24x16xf32>
    %cst = arith.constant dense<0.000000e+00> : vector<24x32xf32>
    %4 = tpu.matmul %3, %2, %cst {dimension_numbers = #tpu.dot_dimension_numbers<[1], [0], [0], [1], [0, 0, 1, 1], [], []>} : vector<24x16xf32>, vector<16x32xf32>, vector<24x32xf32> -> vector<24x32xf32>
    %5 = vector.extract_strided_slice %0 {offsets = [0, 16], sizes = [24, 8], strides = [1, 1]} : vector<24x24xf32> to vector<24x8xf32>
    %c0_5 = arith.constant 0 : index
    %c0_6 = arith.constant 0 : index
    %6 = vector.load %arg4[%c0_5, %c0_6] : memref<8x32xf32, #tpu.memory_space<vmem>>, vector<8x32xf32>
    %cst_7 = arith.constant dense<0.000000e+00> : vector<24x32xf32>
    %7 = tpu.matmul %5, %6, %cst_7 {dimension_numbers = #tpu.dot_dimension_numbers<[1], [0], [0], [1], [0, 0, 1, 1], [], []>} : vector<24x8xf32>, vector<8x32xf32>, vector<24x32xf32> -> vector<24x32xf32>
    %8 = arith.addf %4, %7 : vector<24x32xf32>
    %c0_8 = arith.constant 0 : index
    %c0_9 = arith.constant 0 : index
    %9 = vector.load %arg5[%c0_8, %c0_9] : memref<1x32xf32, #tpu.memory_space<vmem>>, vector<1x32xf32>
    %10 = vector.broadcast %9 : vector<1x32xf32> to vector<24x32xf32>
    %11 = arith.addf %8, %10 : vector<24x32xf32>
    %cst_10 = arith.constant 0.000000e+00 : f32
    %12 = vector.broadcast %cst_10 : f32 to vector<24x32xf32>
    %13 = arith.maximumf %11, %12 : vector<24x32xf32>
    %14 = vector.extract_strided_slice %1 {offsets = [0, 0], sizes = [24, 16], strides = [1, 1]} : vector<24x24xf32> to vector<24x16xf32>
    %cst_11 = arith.constant dense<0.000000e+00> : vector<24x32xf32>
    %15 = tpu.matmul %14, %2, %cst_11 {dimension_numbers = #tpu.dot_dimension_numbers<[1], [0], [0], [1], [0, 0, 1, 1], [], []>} : vector<24x16xf32>, vector<16x32xf32>, vector<24x32xf32> -> vector<24x32xf32>
    %16 = vector.extract_strided_slice %1 {offsets = [0, 16], sizes = [24, 8], strides = [1, 1]} : vector<24x24xf32> to vector<24x8xf32>
    %c0_12 = arith.constant 0 : index
    %c0_13 = arith.constant 0 : index
    %17 = vector.load %arg6[%c0_12, %c0_13] : memref<8x32xf32, #tpu.memory_space<vmem>>, vector<8x32xf32>
    %cst_14 = arith.constant dense<0.000000e+00> : vector<24x32xf32>
    %18 = tpu.matmul %16, %17, %cst_14 {dimension_numbers = #tpu.dot_dimension_numbers<[1], [0], [0], [1], [0, 0, 1, 1], [], []>} : vector<24x8xf32>, vector<8x32xf32>, vector<24x32xf32> -> vector<24x32xf32>
    %19 = arith.addf %15, %18 : vector<24x32xf32>
    %c0_15 = arith.constant 0 : index
    %c0_16 = arith.constant 0 : index
    %20 = vector.load %arg7[%c0_15, %c0_16] : memref<1x32xf32, #tpu.memory_space<vmem>>, vector<1x32xf32>
    %21 = vector.broadcast %20 : vector<1x32xf32> to vector<24x32xf32>
    %22 = arith.addf %19, %21 : vector<24x32xf32>
    %cst_17 = arith.constant 0.000000e+00 : f32
    %23 = vector.broadcast %cst_17 : f32 to vector<24x32xf32>
    %24 = arith.maximumf %22, %23 : vector<24x32xf32>
    %c0_18 = arith.constant 0 : index
    %c0_19 = arith.constant 0 : index
    %25 = vector.load %arg8[%c0_18, %c0_19] : memref<32x12xf32, #tpu.memory_space<vmem>>, vector<32x12xf32>
    %cst_20 = arith.constant dense<0.000000e+00> : vector<24x12xf32>
    %26 = tpu.matmul %13, %25, %cst_20 {dimension_numbers = #tpu.dot_dimension_numbers<[1], [0], [0], [1], [0, 0, 1, 1], [], []>} : vector<24x32xf32>, vector<32x12xf32>, vector<24x12xf32> -> vector<24x12xf32>
    %cst_21 = arith.constant dense<0.000000e+00> : vector<24x12xf32>
    %27 = tpu.matmul %0, %26, %cst_21 {dimension_numbers = #tpu.dot_dimension_numbers<[1], [0], [0], [1], [0, 0, 1, 1], [], []>} : vector<24x24xf32>, vector<24x12xf32>, vector<24x12xf32> -> vector<24x12xf32>
    %c0_22 = arith.constant 0 : index
    %c0_23 = arith.constant 0 : index
    %28 = vector.load %arg9[%c0_22, %c0_23] : memref<1x12xf32, #tpu.memory_space<vmem>>, vector<1x12xf32>
    %29 = vector.broadcast %28 : vector<1x12xf32> to vector<24x12xf32>
    %30 = arith.addf %27, %29 : vector<24x12xf32>
    %c0_24 = arith.constant 0 : index
    %c0_25 = arith.constant 0 : index
    %31 = vector.load %arg10[%c0_24, %c0_25] : memref<32x12xf32, #tpu.memory_space<vmem>>, vector<32x12xf32>
    %cst_26 = arith.constant dense<0.000000e+00> : vector<24x12xf32>
    %32 = tpu.matmul %24, %31, %cst_26 {dimension_numbers = #tpu.dot_dimension_numbers<[1], [0], [0], [1], [0, 0, 1, 1], [], []>} : vector<24x32xf32>, vector<32x12xf32>, vector<24x12xf32> -> vector<24x12xf32>
    %cst_27 = arith.constant dense<0.000000e+00> : vector<24x12xf32>
    %33 = tpu.matmul %1, %32, %cst_27 {dimension_numbers = #tpu.dot_dimension_numbers<[1], [0], [0], [1], [0, 0, 1, 1], [], []>} : vector<24x24xf32>, vector<24x12xf32>, vector<24x12xf32> -> vector<24x12xf32>
    %c0_28 = arith.constant 0 : index
    %c0_29 = arith.constant 0 : index
    %34 = vector.load %arg11[%c0_28, %c0_29] : memref<1x12xf32, #tpu.memory_space<vmem>>, vector<1x12xf32>
    %35 = vector.broadcast %34 : vector<1x12xf32> to vector<24x12xf32>
    %36 = arith.addf %33, %35 : vector<24x12xf32>
    %cst_30 = arith.constant 5.000000e-01 : f32
    %37 = vector.broadcast %cst_30 : f32 to vector<24x12xf32>
    %38 = arith.mulf %37, %36 : vector<24x12xf32>
    %39 = arith.addf %30, %38 : vector<24x12xf32>
    %c0_31 = arith.constant 0 : index
    %c0_32 = arith.constant 0 : index
    %40 = vector.load %arg3[%c0_31, %c0_32] : memref<8x1xi32, #tpu.memory_space<vmem>>, vector<8x1xi32>
    %41 = tpu.iota {dimensions = array<i32: 1>} : vector<8x24xi32>
    %42 = vector.broadcast %40 : vector<8x1xi32> to vector<8x24xi32>
    %43 = arith.cmpi eq, %41, %42 : vector<8x24xi32>
    %44 = arith.extui %43 : vector<8x24xi1> to vector<8x24xi32>
    %45 = arith.sitofp %44 : vector<8x24xi32> to vector<8x24xf32>
    %cst_33 = arith.constant dense<0.000000e+00> : vector<8x12xf32>
    %46 = tpu.matmul %45, %39, %cst_33 {dimension_numbers = #tpu.dot_dimension_numbers<[1], [0], [0], [1], [0, 0, 1, 1], [], []>} : vector<8x24xf32>, vector<24x12xf32>, vector<8x12xf32> -> vector<8x12xf32>
    %cst_34 = arith.constant 0.000000e+00 : f32
    %47 = vector.broadcast %cst_34 : f32 to vector<8x12xf32>
    %48 = arith.maximumf %46, %47 : vector<8x12xf32>
    %c0_35 = arith.constant 0 : index
    %c0_36 = arith.constant 0 : index
    %49 = vector.load %arg12[%c0_35, %c0_36] : memref<12x4xf32, #tpu.memory_space<vmem>>, vector<12x4xf32>
    %cst_37 = arith.constant dense<0.000000e+00> : vector<8x4xf32>
    %50 = tpu.matmul %48, %49, %cst_37 {dimension_numbers = #tpu.dot_dimension_numbers<[1], [0], [0], [1], [0, 0, 1, 1], [], []>} : vector<8x12xf32>, vector<12x4xf32>, vector<8x4xf32> -> vector<8x4xf32>
    %c0_38 = arith.constant 0 : index
    %c0_39 = arith.constant 0 : index
    %51 = vector.load %arg13[%c0_38, %c0_39] : memref<1x4xf32, #tpu.memory_space<vmem>>, vector<1x4xf32>
    %52 = vector.broadcast %51 : vector<1x4xf32> to vector<8x4xf32>
    %53 = arith.addf %50, %52 : vector<8x4xf32>
    %c0_40 = arith.constant 0 : index
    %c0_41 = arith.constant 0 : index
    %54 = vector.load %arg14[%c0_40, %c0_41] : memref<24x32xf32, #tpu.memory_space<vmem>>, vector<24x32xf32>
    tpu.vector_store %arg14[%c0_40, %c0_41], %13 {strides = array<i32>} : memref<24x32xf32, #tpu.memory_space<vmem>>, vector<24x32xf32>,
    %55 = arith.negf %53 : vector<8x4xf32>
    %56 = math.exp %55 : vector<8x4xf32>
    %cst_42 = arith.constant 1.000000e+00 : f32
    %57 = vector.broadcast %cst_42 : f32 to vector<8x4xf32>
    %58 = arith.addf %57, %56 : vector<8x4xf32>
    %59 = arith.divf %57, %58 : vector<8x4xf32>
    %c0_43 = arith.constant 0 : index
    %c0_44 = arith.constant 0 : index
    %60 = vector.load %arg15[%c0_43, %c0_44] : memref<8x4xf32, #tpu.memory_space<vmem>>, vector<8x4xf32>
    tpu.vector_store %arg15[%c0_43, %c0_44], %59 {strides = array<i32>} : memref<8x4xf32, #tpu.memory_space<vmem>>, vector<8x4xf32>,
    return
  }
}

</mosaic_0001>

<llo_original>
// kernel: tpu_custom_call.1
$region0: #{tpu_custom_call.1}
  #allocation0 [shape = 'u32[]', space=smem, size = 0x4, offset = 0x4, fixed_abs, tag = 'smem constant byte address 0x4 - core index']
  #allocation1 [shape = 'u32[144,128]{1,0:T(1,128)}', space=vmem, size = 0x12000, scoped, tag = 'internal scratch']
  %s0 = inlined_call_operand.vmem [shape: f32[24,24], index: 0, kind: input, shape index: {}]
  %s1 = inlined_call_operand.vmem [shape: f32[24,24], index: 1, kind: input, shape index: {}]
  %s2 = inlined_call_operand.vmem [shape: f32[16,32], index: 2, kind: input, shape index: {}]
  %s3 = inlined_call_operand.vmem [shape: s32[8,1], index: 3, kind: input, shape index: {}]
  %s4 = inlined_call_operand.vmem [shape: f32[8,32], index: 4, kind: input, shape index: {}]
  %s5 = inlined_call_operand.vmem [shape: f32[1,32], index: 5, kind: input, shape index: {}]
  %s6 = inlined_call_operand.vmem [shape: f32[8,32], index: 6, kind: input, shape index: {}]
  %s7 = inlined_call_operand.vmem [shape: f32[1,32], index: 7, kind: input, shape index: {}]
  %s8 = inlined_call_operand.vmem [shape: f32[32,12], index: 8, kind: input, shape index: {}]
  %s9 = inlined_call_operand.vmem [shape: f32[1,12], index: 9, kind: input, shape index: {}]
  %s10 = inlined_call_operand.vmem [shape: f32[32,12], index: 10, kind: input, shape index: {}]
  %s11 = inlined_call_operand.vmem [shape: f32[1,12], index: 11, kind: input, shape index: {}]
  %s12 = inlined_call_operand.vmem [shape: f32[12,4], index: 12, kind: input, shape index: {}]
  %s13 = inlined_call_operand.vmem [shape: f32[1,4], index: 13, kind: input, shape index: {}]
  %s14 = inlined_call_operand.hbm [shape: f32[24,32], index: 14, kind: output, shape index: {0}]
  %s15 = inlined_call_operand.vmem [shape: f32[8,4], index: 15, kind: output, shape index: {1}]
  %16 = xla_tuple %s14, %s15
  %s17 = sld [smem:[#allocation0]]
  $region74: #{tpu_custom_call.1} parent=0
    _
  %s19 = ssub.s32 1, %s17
  %s20 = scalar_select 0, %s19, %s17
  $region1: #{tpu_custom_call.1} parent=0
    #allocation2 [shape = 'u8[12288]{0}', space=vmem, size = 0x3000, scoped, tag = 'output window, operand 0, single buffered']
    #allocation3 [shape = 's32[1]{0}', space=sflag, size = 0x4, scoped, tag = 'scoped memory for tpu_custom_call.1']
    %21 = vsyncpa [#allocation3], 0
    // Predicated region
    $region2: #{tpu_custom_call.1} parent=1 // pred_check
      _
    $region3: #{tpu_custom_call.1} parent=1 // pred_check_branch
      %23 = sbr.rel (0) target = $region5
    $region4: #{tpu_custom_call.1} parent=1 // pred_region
      _
    $region5: #{tpu_custom_call.1} parent=1 // pred_fallthru
      _
    // Predicated region
    $region6: #{tpu_custom_call.1} parent=1 // pred_check
      _
    $region7: #{tpu_custom_call.1} parent=1 // pred_check_branch
      %25 = sbr.rel (0) target = $region9
    $region8: #{tpu_custom_call.1} parent=1 // pred_region
      _
    $region9: #{tpu_custom_call.1} parent=1 // pred_fallthru
      _
    // Predicated region
    $region10: #{tpu_custom_call.1} parent=1 // pred_check
      _
    $region11: #{tpu_custom_call.1} parent=1 // pred_check_branch
      %27 = sbr.rel (0) target = $region13
    $region12: #{tpu_custom_call.1} parent=1 // pred_region
      _
    $region13: #{tpu_custom_call.1} parent=1 // pred_fallthru
      _
    // Predicated region
    $region14: #{tpu_custom_call.1} parent=1 // pred_check
      _
    $region15: #{tpu_custom_call.1} parent=1 // pred_check_branch
      %29 = sbr.rel (0) target = $region17
    $region16: #{tpu_custom_call.1} parent=1 // pred_region
      _
    $region17: #{tpu_custom_call.1} parent=1 // pred_fallthru
      _
    // Predicated region
    $region18: #{tpu_custom_call.1} parent=1 // pred_check
      _
    $region19: #{tpu_custom_call.1} parent=1 // pred_check_branch
      %31 = sbr.rel (0) target = $region21
    $region20: #{tpu_custom_call.1} parent=1 // pred_region
      _
    $region21: #{tpu_custom_call.1} parent=1 // pred_fallthru
      _
    // Predicated region
    $region22: #{tpu_custom_call.1} parent=1 // pred_check
      _
    $region23: #{tpu_custom_call.1} parent=1 // pred_check_branch
      %33 = sbr.rel (0) target = $region25
    $region24: #{tpu_custom_call.1} parent=1 // pred_region
      _
    $region25: #{tpu_custom_call.1} parent=1 // pred_fallthru
      _
    // Predicated region
    $region26: #{tpu_custom_call.1} parent=1 // pred_check
      _
    $region27: #{tpu_custom_call.1} parent=1 // pred_check_branch
      %35 = sbr.rel (0) target = $region29
    $region28: #{tpu_custom_call.1} parent=1 // pred_region
      _
    $region29: #{tpu_custom_call.1} parent=1 // pred_fallthru
      _
    // Predicated region
    $region30: #{tpu_custom_call.1} parent=1 // pred_check
      _
    $region31: #{tpu_custom_call.1} parent=1 // pred_check_branch
      %37 = sbr.rel (0) target = $region33
    $region32: #{tpu_custom_call.1} parent=1 // pred_region
      _
    $region33: #{tpu_custom_call.1} parent=1 // pred_fallthru
      _
    // Predicated region
    $region34: #{tpu_custom_call.1} parent=1 // pred_check
      _
    $region35: #{tpu_custom_call.1} parent=1 // pred_check_branch
      %39 = sbr.rel (0) target = $region37
    $region36: #{tpu_custom_call.1} parent=1 // pred_region
      _
    $region37: #{tpu_custom_call.1} parent=1 // pred_fallthru
      _
    // Predicated region
    $region38: #{tpu_custom_call.1} parent=1 // pred_check
      _
    $region39: #{tpu_custom_call.1} parent=1 // pred_check_branch
      %41 = sbr.rel (0) target = $region41
    $region40: #{tpu_custom_call.1} parent=1 // pred_region
      _
    $region41: #{tpu_custom_call.1} parent=1 // pred_fallthru
      _
    // Predicated region
    $region42: #{tpu_custom_call.1} parent=1 // pred_check
      _
    $region43: #{tpu_custom_call.1} parent=1 // pred_check_branch
      %43 = sbr.rel (0) target = $region45
    $region44: #{tpu_custom_call.1} parent=1 // pred_region
      _
    $region45: #{tpu_custom_call.1} parent=1 // pred_fallthru
      _
    // Predicated region
    $region46: #{tpu_custom_call.1} parent=1 // pred_check
      _
    $region47: #{tpu_custom_call.1} parent=1 // pred_check_branch
      %45 = sbr.rel (0) target = $region49
    $region48: #{tpu_custom_call.1} parent=1 // pred_region
      _
    $region49: #{tpu_custom_call.1} parent=1 // pred_fallthru
      _
    // Predicated region
    $region50: #{tpu_custom_call.1} parent=1 // pred_check
      _
    $region51: #{tpu_custom_call.1} parent=1 // pred_check_branch
      %47 = sbr.rel (0) target = $region53
    $region52: #{tpu_custom_call.1} parent=1 // pred_region
      _
    $region53: #{tpu_custom_call.1} parent=1 // pred_fallthru
      _
    // Predicated region
    $region54: #{tpu_custom_call.1} parent=1 // pred_check
      _
    $region55: #{tpu_custom_call.1} parent=1 // pred_check_branch
      %49 = sbr.rel (0) target = $region57
    $region56: #{tpu_custom_call.1} parent=1 // pred_region
      _
    $region57: #{tpu_custom_call.1} parent=1 // pred_fallthru
      _
    %v50 = vld [vmem:[%s0] sm:$0xff]
    %v51 = vld [vmem:[%s0 + $0x8] sm:$0xff]
    %v52 = vld [vmem:[%s0 + $0x10] sm:$0xff]
    %v53 = vld [vmem:[%s1] sm:$0xff]
    %v54 = vld [vmem:[%s1 + $0x8] sm:$0xff]
    %v55 = vld [vmem:[%s1 + $0x10] sm:$0xff]
    %v56 = vld [vmem:[%s2] sm:$0xff]
    %v57 = vld [vmem:[%s2 + $0x8] sm:$0xff]
    %v58 = vld [vmem:[%s4] sm:$0xff]
    %62 = vrot.lane.b32.xlu0 %v50, 112
    %v63 = vpop.permute.xlu0 %62
    %64 = vrot.lane.b32.xlu0 %v51, 112
    %v65 = vpop.permute.xlu0 %64
    %66 = vrot.lane.b32.xlu0 %v52, 112
    %v67 = vpop.permute.xlu0 %66
    %vm68 = vcmask 64512
    %v69 = vsel %vm68, %v63, 0
    %v71 = vsel %vm68, %v65, 0
    %v73 = vsel %vm68, %v67, 0
    %75 = vmatprep.subr.mxu0 0.0
    %76 = vmatpush1.msra.mxu0 %v58
    %77 = vmatprep.subr.mxu0 0.0
    %78 = vmatpush1.msra.mxu0 0.0
    %79 = vmatprep.subr.mxu0 0.0
    %80 = vmatpush1.msra.mxu0 0.0
    %81 = vmatprep.subr.mxu0 0.0
    %82 = vmatpush1.msra.mxu0 0.0
    %83 = vmatprep.subr.mxu0 0.0
    %84 = vmatpush1.msra.mxu0 0.0
    %85 = vmatprep.subr.mxu0 0.0
    %86 = vmatpush1.msra.mxu0 0.0
    %87 = vmatprep.subr.mxu0 0.0
    %88 = vmatpush1.msra.mxu0 0.0
    %89 = vmatprep.subr.mxu0 0.0
    %90 = vmatpush1.msra.mxu0 0.0
    %91 = vmatprep.subr.mxu0 0.0
    %92 = vmatpush1.msra.mxu0 0.0
    %93 = vmatprep.subr.mxu0 0.0
    %94 = vmatpush1.msra.mxu0 0.0
    %95 = vmatprep.subr.mxu0 0.0
    %96 = vmatpush1.msra.mxu0 0.0
    %97 = vmatprep.subr.mxu0 0.0
    %98 = vmatpush1.msra.mxu0 0.0
    %99 = vmatprep.subr.mxu0 0.0
    %100 = vmatpush1.msra.mxu0 0.0
    %101 = vmatprep.subr.mxu0 0.0
    %102 = vmatpush1.msra.mxu0 0.0
    %103 = vmatprep.subr.mxu0 0.0
    %104 = vmatpush1.msra.mxu0 0.0
    %105 = vmatprep.subr.mxu0 0.0
    %106 = vmatpush1.msra.mxu0 0.0
    %107 = vmatprep.subr.mxu0 0.0
    %108 = vmatpush1.msra.mxu0 0.0
    %109 = vmatprep.subr.mxu0 0.0
    %110 = vmatpush1.msra.mxu0 0.0
    %111 = vmatprep.subr.mxu0 0.0
    %112 = vmatpush1.msra.mxu0 0.0
    %113 = vmatprep.subr.mxu0 0.0
    %114 = vmatpush1.msra.mxu0 0.0
    %115 = vmatprep.subr.mxu0 0.0
    %116 = vmatpush1.msra.mxu0 0.0
    %117 = vmatprep.subr.mxu0 0.0
    %118 = vmatpush1.msra.mxu0 0.0
    %119 = vmatprep.subr.mxu0 0.0
    %120 = vmatpush1.msra.mxu0 0.0
    %121 = vmatprep.subr.mxu0 0.0
    %122 = vmatpush1.msra.mxu0 0.0
    %123 = vmatprep.subr.mxu0 0.0
    %124 = vmatpush1.msra.mxu0 0.0
    %125 = vmatprep.subr.mxu0 0.0
    %126 = vmatpush1.msra.mxu0 0.0
    %127 = vmatprep.subr.mxu0 0.0
    %128 = vmatpush1.msra.mxu0 0.0
    %129 = vmatprep.subr.mxu0 0.0
    %130 = vmatpush1.msra.mxu0 0.0
    %131 = vmatprep.subr.mxu0 0.0
    %132 = vmatpush1.msra.mxu0 0.0
    %133 = vmatprep.subr.mxu0 0.0
    %134 = vmatpush1.msra.mxu0 0.0
    %135 = vmatprep.subr.mxu0 0.0
    %136 = vmatpush1.msra.mxu0 0.0
    %137 = vmatprep.subr.mxu0 0.0
    %138 = vmatpush1.msra.mxu0 0.0
    %139 = vmatprep.mubr.f32.mxu0 0.0
    %140 = vmatmul.mubr.f32.gmra.mrb[0].mxu0 %v69
    %v141 = vpop.f32.mrb[0].mxu0
    %v142 = vadd.f32 0.0, %v141
    %v143 = vpop.f32.mrb[0].mxu0
    %144 = vmatprep.mubr.f32.mxu0 0.0
    %145 = vmatmul.mubr.f32.gmra.mrb[0].mxu0 %v71
    %v146 = vpop.f32.mrb[0].mxu0
    %v147 = vadd.f32 0.0, %v146
    %v148 = vpop.f32.mrb[0].mxu0
    %149 = vmatprep.mubr.f32.mxu0 0.0
    %150 = vmatmul.mubr.f32.gmra.mrb[0].mxu0 %v73
    %v151 = vpop.f32.mrb[0].mxu0
    %v152 = vadd.f32 0.0, %v151
    %v153 = vpop.f32.mrb[0].mxu0
    %154 = vdwg.mxu0
    %vm155 = vcmask 130048
    %v156 = vsel %vm155, %v50, 0
    %v158 = vsel %vm155, %v51, 0
    %v160 = vsel %vm155, %v52, 0
    %162 = vmatprep.subr.mxu0 0.0
    %163 = vmatpush1.msra.mxu0 %v56
    %164 = vmatprep.subr.mxu0 0.0
    %165 = vmatpush1.msra.mxu0 %v57
    %166 = vmatprep.subr.mxu0 0.0
    %167 = vmatpush1.msra.mxu0 0.0
    %168 = vmatprep.subr.mxu0 0.0
    %169 = vmatpush1.msra.mxu0 0.0
    %170 = vmatprep.subr.mxu0 0.0
    %171 = vmatpush1.msra.mxu0 0.0
    %172 = vmatprep.subr.mxu0 0.0
    %173 = vmatpush1.msra.mxu0 0.0
    %174 = vmatprep.subr.mxu0 0.0
    %175 = vmatpush1.msra.mxu0 0.0
    %176 = vmatprep.subr.mxu0 0.0
    %177 = vmatpush1.msra.mxu0 0.0
    %178 = vmatprep.subr.mxu0 0.0
    %179 = vmatpush1.msra.mxu0 0.0
    %180 = vmatprep.subr.mxu0 0.0
    %181 = vmatpush1.msra.mxu0 0.0
    %182 = vmatprep.subr.mxu0 0.0
    %183 = vmatpush1.msra.mxu0 0.0
    %184 = vmatprep.subr.mxu0 0.0
    %185 = vmatpush1.msra.mxu0 0.0
    %186 = vmatprep.subr.mxu0 0.0
    %187 = vmatpush1.msra.mxu0 0.0
    %188 = vmatprep.subr.mxu0 0.0
    %189 = vmatpush1.msra.mxu0 0.0
    %190 = vmatprep.subr.mxu0 0.0
    %191 = vmatpush1.msra.mxu0 0.0
    %192 = vmatprep.subr.mxu0 0.0
    %193 = vmatpush1.msra.mxu0 0.0
    %194 = vmatprep.subr.mxu0 0.0
    %195 = vmatpush1.msra.mxu0 0.0
    %196 = vmatprep.subr.mxu0 0.0
    %197 = vmatpush1.msra.mxu0 0.0
    %198 = vmatprep.subr.mxu0 0.0
    %199 = vmatpush1.msra.mxu0 0.0
    %200 = vmatprep.subr.mxu0 0.0
    %201 = vmatpush1.msra.mxu0 0.0
    %202 = vmatprep.subr.mxu0 0.0
    %203 = vmatpush1.msra.mxu0 0.0
    %204 = vmatprep.subr.mxu0 0.0
    %205 = vmatpush1.msra.mxu0 0.0
    %206 = vmatprep.subr.mxu0 0.0
    %207 = vmatpush1.msra.mxu0 0.0
    %208 = vmatprep.subr.mxu0 0.0
    %209 = vmatpush1.msra.mxu0 0.0
    %210 = vmatprep.subr.mxu0 0.0
    %211 = vmatpush1.msra.mxu0 0.0
    %212 = vmatprep.subr.mxu0 0.0
    %213 = vmatpush1.msra.mxu0 0.0
    %214 = vmatprep.subr.mxu0 0.0
    %215 = vmatpush1.msra.mxu0 0.0
    %216 = vmatprep.subr.mxu0 0.0
    %217 = vmatpush1.msra.mxu0 0.0
    %218 = vmatprep.subr.mxu0 0.0
    %219 = vmatpush1.msra.mxu0 0.0
    %220 = vmatprep.subr.mxu0 0.0
    %221 = vmatpush1.msra.mxu0 0.0
    %222 = vmatprep.subr.mxu0 0.0
    %223 = vmatpush1.msra.mxu0 0.0
    %224 = vmatprep.subr.mxu0 0.0
    %225 = vmatpush1.msra.mxu0 0.0
    %226 = vmatprep.mubr.f32.mxu0 0.0
    %227 = vmatmul.mubr.f32.gmra.mrb[0].mxu0 %v156
    %v228 = vpop.f32.mrb[0].mxu0
    %v229 = vadd.f32 %v142, %v228
    %v230 = vpop.f32.mrb[0].mxu0
    %231 = vmatprep.mubr.f32.mxu0 0.0
    %232 = vmatmul.mubr.f32.gmra.mrb[0].mxu0 %v158
    %v233 = vpop.f32.mrb[0].mxu0
    %v234 = vadd.f32 %v147, %v233
    %v235 = vpop.f32.mrb[0].mxu0
    %236 = vmatprep.mubr.f32.mxu0 0.0
    %237 = vmatmul.mubr.f32.gmra.mrb[0].mxu0 %v160
    %v238 = vpop.f32.mrb[0].mxu0
    %v239 = vadd.f32 %v152, %v238
    %v240 = vpop.f32.mrb[0].mxu0
    %241 = vdwg.mxu0
    %v242 = vld [vmem:[%s5] sm:$0x1]
    %v244 = vlaneseq
    %v245 = vshrl.u32 %v244, 7
    %v246 = vsub.s32 0, %v245
    %v247 = vrot.slane %v242, %v246
    %v249 = vadd.f32 %v229, %v247
    %v250 = vadd.f32 %v234, %v247
    %v251 = vadd.f32 %v239, %v247
    %v252 = vmax.f32 %v249, 0.0
    %v253 = vmax.f32 %v250, 0.0
    %v254 = vmax.f32 %v251, 0.0
    %v255 = vld [vmem:[%s6] sm:$0xff]
    %259 = vrot.lane.b32.xlu0 %v53, 112
    %v260 = vpop.permute.xlu0 %259
    %261 = vrot.lane.b32.xlu0 %v54, 112
    %v262 = vpop.permute.xlu0 %261
    %263 = vrot.lane.b32.xlu0 %v55, 112
    %v264 = vpop.permute.xlu0 %263
    %v265 = vsel %vm68, %v260, 0
    %v267 = vsel %vm68, %v262, 0
    %v269 = vsel %vm68, %v264, 0
    %271 = vmatprep.subr.mxu0 0.0
    %272 = vmatpush1.msra.mxu0 %v255
    %273 = vmatprep.subr.mxu0 0.0
    %274 = vmatpush1.msra.mxu0 0.0
    %275 = vmatprep.subr.mxu0 0.0
    %276 = vmatpush1.msra.mxu0 0.0
    %277 = vmatprep.subr.mxu0 0.0
    %278 = vmatpush1.msra.mxu0 0.0
    %279 = vmatprep.subr.mxu0 0.0
    %280 = vmatpush1.msra.mxu0 0.0
    %281 = vmatprep.subr.mxu0 0.0
    %282 = vmatpush1.msra.mxu0 0.0
    %283 = vmatprep.subr.mxu0 0.0
    %284 = vmatpush1.msra.mxu0 0.0
    %285 = vmatprep.subr.mxu0 0.0
    %286 = vmatpush1.msra.mxu0 0.0
    %287 = vmatprep.subr.mxu0 0.0
    %288 = vmatpush1.msra.mxu0 0.0
    %289 = vmatprep.subr.mxu0 0.0
    %290 = vmatpush1.msra.mxu0 0.0
    %291 = vmatprep.subr.mxu0 0.0
    %292 = vmatpush1.msra.mxu0 0.0
    %293 = vmatprep.subr.mxu0 0.0
    %294 = vmatpush1.msra.mxu0 0.0
    %295 = vmatprep.subr.mxu0 0.0
    %296 = vmatpush1.msra.mxu0 0.0
    %297 = vmatprep.subr.mxu0 0.0
    %298 = vmatpush1.msra.mxu0 0.0
    %299 = vmatprep.subr.mxu0 0.0
    %300 = vmatpush1.msra.mxu0 0.0
    %301 = vmatprep.subr.mxu0 0.0
    %302 = vmatpush1.msra.mxu0 0.0
    %303 = vmatprep.subr.mxu0 0.0
    %304 = vmatpush1.msra.mxu0 0.0
    %305 = vmatprep.subr.mxu0 0.0
    %306 = vmatpush1.msra.mxu0 0.0
    %307 = vmatprep.subr.mxu0 0.0
    %308 = vmatpush1.msra.mxu0 0.0
    %309 = vmatprep.subr.mxu0 0.0
    %310 = vmatpush1.msra.mxu0 0.0
    %311 = vmatprep.subr.mxu0 0.0
    %312 = vmatpush1.msra.mxu0 0.0
    %313 = vmatprep.subr.mxu0 0.0
    %314 = vmatpush1.msra.mxu0 0.0
    %315 = vmatprep.subr.mxu0 0.0
    %316 = vmatpush1.msra.mxu0 0.0
    %317 = vmatprep.subr.mxu0 0.0
    %318 = vmatpush1.msra.mxu0 0.0
    %319 = vmatprep.subr.mxu0 0.0
    %320 = vmatpush1.msra.mxu0 0.0
    %321 = vmatprep.subr.mxu0 0.0
    %322 = vmatpush1.msra.mxu0 0.0
    %323 = vmatprep.subr.mxu0 0.0
    %324 = vmatpush1.msra.mxu0 0.0
    %325 = vmatprep.subr.mxu0 0.0
    %326 = vmatpush1.msra.mxu0 0.0
    %327 = vmatprep.subr.mxu0 0.0
    %328 = vmatpush1.msra.mxu0 0.0
    %329 = vmatprep.subr.mxu0 0.0
    %330 = vmatpush1.msra.mxu0 0.0
    %331 = vmatprep.subr.mxu0 0.0
    %332 = vmatpush1.msra.mxu0 0.0
    %333 = vmatprep.subr.mxu0 0.0
    %334 = vmatpush1.msra.mxu0 0.0
    %335 = vmatprep.mubr.f32.mxu0 0.0
    %336 = vmatmul.mubr.f32.gmra.mrb[0].mxu0 %v265
    %v337 = vpop.f32.mrb[0].mxu0
    %v338 = vadd.f32 0.0, %v337
    %v339 = vpop.f32.mrb[0].mxu0
    %340 = vmatprep.mubr.f32.mxu0 0.0
    %341 = vmatmul.mubr.f32.gmra.mrb[0].mxu0 %v267
    %v342 = vpop.f32.mrb[0].mxu0
    %v343 = vadd.f32 0.0, %v342
    %v344 = vpop.f32.mrb[0].mxu0
    %345 = vmatprep.mubr.f32.mxu0 0.0
    %346 = vmatmul.mubr.f32.gmra.mrb[0].mxu0 %v269
    %v347 = vpop.f32.mrb[0].mxu0
    %v348 = vadd.f32 0.0, %v347
    %v349 = vpop.f32.mrb[0].mxu0
    %350 = vdwg.mxu0
    %v351 = vsel %vm155, %v53, 0
    %v353 = vsel %vm155, %v54, 0
    %v355 = vsel %vm155, %v55, 0
    %357 = vmatprep.subr.mxu0 0.0
    %358 = vmatpush1.msra.mxu0 %v56
    %359 = vmatprep.subr.mxu0 0.0
    %360 = vmatpush1.msra.mxu0 %v57
    %361 = vmatprep.subr.mxu0 0.0
    %362 = vmatpush1.msra.mxu0 0.0
    %363 = vmatprep.subr.mxu0 0.0
    %364 = vmatpush1.msra.mxu0 0.0
    %365 = vmatprep.subr.mxu0 0.0
    %366 = vmatpush1.msra.mxu0 0.0
    %367 = vmatprep.subr.mxu0 0.0
    %368 = vmatpush1.msra.mxu0 0.0
    %369 = vmatprep.subr.mxu0 0.0
    %370 = vmatpush1.msra.mxu0 0.0
    %371 = vmatprep.subr.mxu0 0.0
    %372 = vmatpush1.msra.mxu0 0.0
    %373 = vmatprep.subr.mxu0 0.0
    %374 = vmatpush1.msra.mxu0 0.0
    %375 = vmatprep.subr.mxu0 0.0
    %376 = vmatpush1.msra.mxu0 0.0
    %377 = vmatprep.subr.mxu0 0.0
    %378 = vmatpush1.msra.mxu0 0.0
    %379 = vmatprep.subr.mxu0 0.0
    %380 = vmatpush1.msra.mxu0 0.0
    %381 = vmatprep.subr.mxu0 0.0
    %382 = vmatpush1.msra.mxu0 0.0
    %383 = vmatprep.subr.mxu0 0.0
    %384 = vmatpush1.msra.mxu0 0.0
    %385 = vmatprep.subr.mxu0 0.0
    %386 = vmatpush1.msra.mxu0 0.0
    %387 = vmatprep.subr.mxu0 0.0
    %388 = vmatpush1.msra.mxu0 0.0
    %389 = vmatprep.subr.mxu0 0.0
    %390 = vmatpush1.msra.mxu0 0.0
    %391 = vmatprep.subr.mxu0 0.0
    %392 = vmatpush1.msra.mxu0 0.0
    %393 = vmatprep.subr.mxu0 0.0
    %394 = vmatpush1.msra.mxu0 0.0
    %395 = vmatprep.subr.mxu0 0.0
    %396 = vmatpush1.msra.mxu0 0.0
    %397 = vmatprep.subr.mxu0 0.0
    %398 = vmatpush1.msra.mxu0 0.0
    %399 = vmatprep.subr.mxu0 0.0
    %400 = vmatpush1.msra.mxu0 0.0
    %401 = vmatprep.subr.mxu0 0.0
    %402 = vmatpush1.msra.mxu0 0.0
    %403 = vmatprep.subr.mxu0 0.0
    %404 = vmatpush1.msra.mxu0 0.0
    %405 = vmatprep.subr.mxu0 0.0
    %406 = vmatpush1.msra.mxu0 0.0
    %407 = vmatprep.subr.mxu0 0.0
    %408 = vmatpush1.msra.mxu0 0.0
    %409 = vmatprep.subr.mxu0 0.0
    %410 = vmatpush1.msra.mxu0 0.0
    %411 = vmatprep.subr.mxu0 0.0
    %412 = vmatpush1.msra.mxu0 0.0
    %413 = vmatprep.subr.mxu0 0.0
    %414 = vmatpush1.msra.mxu0 0.0
    %415 = vmatprep.subr.mxu0 0.0
    %416 = vmatpush1.msra.mxu0 0.0
    %417 = vmatprep.subr.mxu0 0.0
    %418 = vmatpush1.msra.mxu0 0.0
    %419 = vmatprep.subr.mxu0 0.0
    %420 = vmatpush1.msra.mxu0 0.0
    %421 = vmatprep.mubr.f32.mxu0 0.0
    %422 = vmatmul.mubr.f32.gmra.mrb[0].mxu0 %v351
    %v423 = vpop.f32.mrb[0].mxu0
    %v424 = vadd.f32 %v338, %v423
    %v425 = vpop.f32.mrb[0].mxu0
    %426 = vmatprep.mubr.f32.mxu0 0.0
    %427 = vmatmul.mubr.f32.gmra.mrb[0].mxu0 %v353
    %v428 = vpop.f32.mrb[0].mxu0
    %v429 = vadd.f32 %v343, %v428
    %v430 = vpop.f32.mrb[0].mxu0
    %431 = vmatprep.mubr.f32.mxu0 0.0
    %432 = vmatmul.mubr.f32.gmra.mrb[0].mxu0 %v355
    %v433 = vpop.f32.mrb[0].mxu0
    %v434 = vadd.f32 %v348, %v433
    %v435 = vpop.f32.mrb[0].mxu0
    %436 = vdwg.mxu0
    %v437 = vld [vmem:[%s7] sm:$0x1]
    %v439 = vlaneseq
    %v440 = vshrl.u32 %v439, 7
    %v441 = vsub.s32 0, %v440
    %v442 = vrot.slane %v437, %v441
    %v444 = vadd.f32 %v424, %v442
    %v445 = vadd.f32 %v429, %v442
    %v446 = vadd.f32 %v434, %v442
    %v447 = vmax.f32 %v444, 0.0
    %v448 = vmax.f32 %v445, 0.0
    %v449 = vmax.f32 %v446, 0.0
    %v450 = vld [vmem:[%s8] sm:$0xff]
    %v451 = vld [vmem:[%s8 + $0x8] sm:$0xff]
    %v452 = vld [vmem:[%s8 + $0x10] sm:$0xff]
    %v453 = vld [vmem:[%s8 + $0x18] sm:$0xff]
    %vm454 = vcmask 261120
    %v456 = vsel %vm454, %v252, 0
    %v459 = vsel %vm454, %v253, 0
    %v462 = vsel %vm454, %v254, 0
    %464 = vmatprep.subr.mxu0 0.0
    %465 = vmatpush1.msra.mxu0 %v450
    %466 = vmatprep.subr.mxu0 0.0
    %467 = vmatpush1.msra.mxu0 %v451
    %468 = vmatprep.subr.mxu0 0.0
    %469 = vmatpush1.msra.mxu0 %v452
    %470 = vmatprep.subr.mxu0 0.0
    %471 = vmatpush1.msra.mxu0 %v453
    %472 = vmatprep.subr.mxu0 0.0
    %473 = vmatpush1.msra.mxu0 0.0
    %474 = vmatprep.subr.mxu0 0.0
    %475 = vmatpush1.msra.mxu0 0.0
    %476 = vmatprep.subr.mxu0 0.0
    %477 = vmatpush1.msra.mxu0 0.0
    %478 = vmatprep.subr.mxu0 0.0
    %479 = vmatpush1.msra.mxu0 0.0
    %480 = vmatprep.subr.mxu0 0.0
    %481 = vmatpush1.msra.mxu0 0.0
    %482 = vmatprep.subr.mxu0 0.0
    %483 = vmatpush1.msra.mxu0 0.0
    %484 = vmatprep.subr.mxu0 0.0
    %485 = vmatpush1.msra.mxu0 0.0
    %486 = vmatprep.subr.mxu0 0.0
    %487 = vmatpush1.msra.mxu0 0.0
    %488 = vmatprep.subr.mxu0 0.0
    %489 = vmatpush1.msra.mxu0 0.0
    %490 = vmatprep.subr.mxu0 0.0
    %491 = vmatpush1.msra.mxu0 0.0
    %492 = vmatprep.subr.mxu0 0.0
    %493 = vmatpush1.msra.mxu0 0.0
    %494 = vmatprep.subr.mxu0 0.0
    %495 = vmatpush1.msra.mxu0 0.0
    %496 = vmatprep.subr.mxu0 0.0
    %497 = vmatpush1.msra.mxu0 0.0
    %498 = vmatprep.subr.mxu0 0.0
    %499 = vmatpush1.msra.mxu0 0.0
    %500 = vmatprep.subr.mxu0 0.0
    %501 = vmatpush1.msra.mxu0 0.0
    %502 = vmatprep.subr.mxu0 0.0
    %503 = vmatpush1.msra.mxu0 0.0
    %504 = vmatprep.subr.mxu0 0.0
    %505 = vmatpush1.msra.mxu0 0.0
    %506 = vmatprep.subr.mxu0 0.0
    %507 = vmatpush1.msra.mxu0 0.0
    %508 = vmatprep.subr.mxu0 0.0
    %509 = vmatpush1.msra.mxu0 0.0
    %510 = vmatprep.subr.mxu0 0.0
    %511 = vmatpush1.msra.mxu0 0.0
    %512 = vmatprep.subr.mxu0 0.0
    %513 = vmatpush1.msra.mxu0 0.0
    %514 = vmatprep.subr.mxu0 0.0
    %515 = vmatpush1.msra.mxu0 0.0
    %516 = vmatprep.subr.mxu0 0.0
    %517 = vmatpush1.msra.mxu0 0.0
    %518 = vmatprep.subr.mxu0 0.0
    %519 = vmatpush1.msra.mxu0 0.0
    %520 = vmatprep.subr.mxu0 0.0
    %521 = vmatpush1.msra.mxu0 0.0
    %522 = vmatprep.subr.mxu0 0.0
    %523 = vmatpush1.msra.mxu0 0.0
    %524 = vmatprep.subr.mxu0 0.0
    %525 = vmatpush1.msra.mxu0 0.0
    %526 = vmatprep.subr.mxu0 0.0
    %527 = vmatpush1.msra.mxu0 0.0
    %528 = vmatprep.mubr.f32.mxu0 0.0
    %529 = vmatmul.mubr.f32.gmra.mrb[0].mxu0 %v456
    %v530 = vpop.f32.mrb[0].mxu0
    %v531 = vadd.f32 0.0, %v530
    %v532 = vpop.f32.mrb[0].mxu0
    %533 = vmatprep.mubr.f32.mxu0 0.0
    %534 = vmatmul.mubr.f32.gmra.mrb[0].mxu0 %v459
    %v535 = vpop.f32.mrb[0].mxu0
    %v536 = vadd.f32 0.0, %v535
    %v537 = vpop.f32.mrb[0].mxu0
    %538 = vmatprep.mubr.f32.mxu0 0.0
    %539 = vmatmul.mubr.f32.gmra.mrb[0].mxu0 %v462
    %v540 = vpop.f32.mrb[0].mxu0
    %v541 = vadd.f32 0.0, %v540
    %v542 = vpop.f32.mrb[0].mxu0
    %543 = vdwg.mxu0
    %v544 = vld [vmem:[%s9] sm:$0x1]
    %v546 = vlaneseq
    %v547 = vshrl.u32 %v546, 7
    %v548 = vsub.s32 0, %v547
    %v549 = vrot.slane %v544, %v548
    %vm551 = vcmask 195584
    %v552 = vsel %vm551, %v50, 0
    %v554 = vsel %vm551, %v51, 0
    %v556 = vsel %vm551, %v52, 0
    %558 = vmatprep.subr.mxu0 0.0
    %559 = vmatpush1.msra.mxu0 %v531
    %560 = vmatprep.subr.mxu0 0.0
    %561 = vmatpush1.msra.mxu0 %v536
    %562 = vmatprep.subr.mxu0 0.0
    %563 = vmatpush1.msra.mxu0 %v541
    %564 = vmatprep.subr.mxu0 0.0
    %565 = vmatpush1.msra.mxu0 0.0
    %566 = vmatprep.subr.mxu0 0.0
    %567 = vmatpush1.msra.mxu0 0.0
    %568 = vmatprep.subr.mxu0 0.0
    %569 = vmatpush1.msra.mxu0 0.0
    %570 = vmatprep.subr.mxu0 0.0
    %571 = vmatpush1.msra.mxu0 0.0
    %572 = vmatprep.subr.mxu0 0.0
    %573 = vmatpush1.msra.mxu0 0.0
    %574 = vmatprep.subr.mxu0 0.0
    %575 = vmatpush1.msra.mxu0 0.0
    %576 = vmatprep.subr.mxu0 0.0
    %577 = vmatpush1.msra.mxu0 0.0
    %578 = vmatprep.subr.mxu0 0.0
    %579 = vmatpush1.msra.mxu0 0.0
    %580 = vmatprep.subr.mxu0 0.0
    %581 = vmatpush1.msra.mxu0 0.0
    %582 = vmatprep.subr.mxu0 0.0
    %583 = vmatpush1.msra.mxu0 0.0
    %584 = vmatprep.subr.mxu0 0.0
    %585 = vmatpush1.msra.mxu0 0.0
    %586 = vmatprep.subr.mxu0 0.0
    %587 = vmatpush1.msra.mxu0 0.0
    %588 = vmatprep.subr.mxu0 0.0
    %589 = vmatpush1.msra.mxu0 0.0
    %590 = vmatprep.subr.mxu0 0.0
    %591 = vmatpush1.msra.mxu0 0.0
    %592 = vmatprep.subr.mxu0 0.0
    %593 = vmatpush1.msra.mxu0 0.0
    %594 = vmatprep.subr.mxu0 0.0
    %595 = vmatpush1.msra.mxu0 0.0
    %596 = vmatprep.subr.mxu0 0.0
    %597 = vmatpush1.msra.mxu0 0.0
    %598 = vmatprep.subr.mxu0 0.0
    %599 = vmatpush1.msra.mxu0 0.0
    %600 = vmatprep.subr.mxu0 0.0
    %601 = vmatpush1.msra.mxu0 0.0
    %602 = vmatprep.subr.mxu0 0.0
    %603 = vmatpush1.msra.mxu0 0.0
    %604 = vmatprep.subr.mxu0 0.0
    %605 = vmatpush1.msra.mxu0 0.0
    %606 = vmatprep.subr.mxu0 0.0
    %607 = vmatpush1.msra.mxu0 0.0
    %608 = vmatprep.subr.mxu0 0.0
    %609 = vmatpush1.msra.mxu0 0.0
    %610 = vmatprep.subr.mxu0 0.0
    %611 = vmatpush1.msra.mxu0 0.0
    %612 = vmatprep.subr.mxu0 0.0
    %613 = vmatpush1.msra.mxu0 0.0
    %614 = vmatprep.subr.mxu0 0.0
    %615 = vmatpush1.msra.mxu0 0.0
    %616 = vmatprep.subr.mxu0 0.0
    %617 = vmatpush1.msra.mxu0 0.0
    %618 = vmatprep.subr.mxu0 0.0
    %619 = vmatpush1.msra.mxu0 0.0
    %620 = vmatprep.subr.mxu0 0.0
    %621 = vmatpush1.msra.mxu0 0.0
    %622 = vmatprep.mubr.f32.mxu0 0.0
    %623 = vmatmul.mubr.f32.gmra.mrb[0].mxu0 %v552
    %v624 = vpop.f32.mrb[0].mxu0
    %v625 = vadd.f32 %v549, %v624
    %v626 = vpop.f32.mrb[0].mxu0
    %627 = vmatprep.mubr.f32.mxu0 0.0
    %628 = vmatmul.mubr.f32.gmra.mrb[0].mxu0 %v554
    %v629 = vpop.f32.mrb[0].mxu0
    %v630 = vadd.f32 %v549, %v629
    %v631 = vpop.f32.mrb[0].mxu0
    %632 = vmatprep.mubr.f32.mxu0 0.0
    %633 = vmatmul.mubr.f32.gmra.mrb[0].mxu0 %v556
    %v634 = vpop.f32.mrb[0].mxu0
    %v635 = vadd.f32 %v549, %v634
    %v636 = vpop.f32.mrb[0].mxu0
    %637 = vdwg.mxu0
    %v638 = vld [vmem:[%s10] sm:$0xff]
    %v639 = vld [vmem:[%s10 + $0x8] sm:$0xff]
    %v640 = vld [vmem:[%s10 + $0x10] sm:$0xff]
    %v641 = vld [vmem:[%s10 + $0x18] sm:$0xff]
    %v643 = vsel %vm454, %v447, 0
    %v646 = vsel %vm454, %v448, 0
    %v649 = vsel %vm454, %v449, 0
    %651 = vmatprep.subr.mxu0 0.0
    %652 = vmatpush1.msra.mxu0 %v638
    %653 = vmatprep.subr.mxu0 0.0
    %654 = vmatpush1.msra.mxu0 %v639
    %655 = vmatprep.subr.mxu0 0.0
    %656 = vmatpush1.msra.mxu0 %v640
    %657 = vmatprep.subr.mxu0 0.0
    %658 = vmatpush1.msra.mxu0 %v641
    %659 = vmatprep.subr.mxu0 0.0
    %660 = vmatpush1.msra.mxu0 0.0
    %661 = vmatprep.subr.mxu0 0.0
    %662 = vmatpush1.msra.mxu0 0.0
    %663 = vmatprep.subr.mxu0 0.0
    %664 = vmatpush1.msra.mxu0 0.0
    %665 = vmatprep.subr.mxu0 0.0
    %666 = vmatpush1.msra.mxu0 0.0
    %667 = vmatprep.subr.mxu0 0.0
    %668 = vmatpush1.msra.mxu0 0.0
    %669 = vmatprep.subr.mxu0 0.0
    %670 = vmatpush1.msra.mxu0 0.0
    %671 = vmatprep.subr.mxu0 0.0
    %672 = vmatpush1.msra.mxu0 0.0
    %673 = vmatprep.subr.mxu0 0.0
    %674 = vmatpush1.msra.mxu0 0.0
    %675 = vmatprep.subr.mxu0 0.0
    %676 = vmatpush1.msra.mxu0 0.0
    %677 = vmatprep.subr.mxu0 0.0
    %678 = vmatpush1.msra.mxu0 0.0
    %679 = vmatprep.subr.mxu0 0.0
    %680 = vmatpush1.msra.mxu0 0.0
    %681 = vmatprep.subr.mxu0 0.0
    %682 = vmatpush1.msra.mxu0 0.0
    %683 = vmatprep.subr.mxu0 0.0
    %684 = vmatpush1.msra.mxu0 0.0
    %685 = vmatprep.subr.mxu0 0.0
    %686 = vmatpush1.msra.mxu0 0.0
    %687 = vmatprep.subr.mxu0 0.0
    %688 = vmatpush1.msra.mxu0 0.0
    %689 = vmatprep.subr.mxu0 0.0
    %690 = vmatpush1.msra.mxu0 0.0
    %691 = vmatprep.subr.mxu0 0.0
    %692 = vmatpush1.msra.mxu0 0.0
    %693 = vmatprep.subr.mxu0 0.0
    %694 = vmatpush1.msra.mxu0 0.0
    %695 = vmatprep.subr.mxu0 0.0
    %696 = vmatpush1.msra.mxu0 0.0
    %697 = vmatprep.subr.mxu0 0.0
    %698 = vmatpush1.msra.mxu0 0.0
    %699 = vmatprep.subr.mxu0 0.0
    %700 = vmatpush1.msra.mxu0 0.0
    %701 = vmatprep.subr.mxu0 0.0
    %702 = vmatpush1.msra.mxu0 0.0
    %703 = vmatprep.subr.mxu0 0.0
    %704 = vmatpush1.msra.mxu0 0.0
    %705 = vmatprep.subr.mxu0 0.0
    %706 = vmatpush1.msra.mxu0 0.0
    %707 = vmatprep.subr.mxu0 0.0
    %708 = vmatpush1.msra.mxu0 0.0
    %709 = vmatprep.subr.mxu0 0.0
    %710 = vmatpush1.msra.mxu0 0.0
    %711 = vmatprep.subr.mxu0 0.0
    %712 = vmatpush1.msra.mxu0 0.0
    %713 = vmatprep.subr.mxu0 0.0
    %714 = vmatpush1.msra.mxu0 0.0
    %715 = vmatprep.mubr.f32.mxu0 0.0
    %716 = vmatmul.mubr.f32.gmra.mrb[0].mxu0 %v643
    %v717 = vpop.f32.mrb[0].mxu0
    %v718 = vadd.f32 0.0, %v717
    %v719 = vpop.f32.mrb[0].mxu0
    %720 = vmatprep.mubr.f32.mxu0 0.0
    %721 = vmatmul.mubr.f32.gmra.mrb[0].mxu0 %v646
    %v722 = vpop.f32.mrb[0].mxu0
    %v723 = vadd.f32 0.0, %v722
    %v724 = vpop.f32.mrb[0].mxu0
    %725 = vmatprep.mubr.f32.mxu0 0.0
    %726 = vmatmul.mubr.f32.gmra.mrb[0].mxu0 %v649
    %v727 = vpop.f32.mrb[0].mxu0
    %v728 = vadd.f32 0.0, %v727
    %v729 = vpop.f32.mrb[0].mxu0
    %730 = vdwg.mxu0
    %v731 = vld [vmem:[%s11] sm:$0x1]
    %v733 = vlaneseq
    %v734 = vshrl.u32 %v733, 7
    %v735 = vsub.s32 0, %v734
    %v736 = vrot.slane %v731, %v735
    %v738 = vsel %vm551, %v53, 0
    %v740 = vsel %vm551, %v54, 0
    %v742 = vsel %vm551, %v55, 0
    %744 = vmatprep.subr.mxu0 0.0
    %745 = vmatpush1.msra.mxu0 %v718
    %746 = vmatprep.subr.mxu0 0.0
    %747 = vmatpush1.msra.mxu0 %v723
    %748 = vmatprep.subr.mxu0 0.0
    %749 = vmatpush1.msra.mxu0 %v728
    %750 = vmatprep.subr.mxu0 0.0
    %751 = vmatpush1.msra.mxu0 0.0
    %752 = vmatprep.subr.mxu0 0.0
    %753 = vmatpush1.msra.mxu0 0.0
    %754 = vmatprep.subr.mxu0 0.0
    %755 = vmatpush1.msra.mxu0 0.0
    %756 = vmatprep.subr.mxu0 0.0
    %757 = vmatpush1.msra.mxu0 0.0
    %758 = vmatprep.subr.mxu0 0.0
    %759 = vmatpush1.msra.mxu0 0.0
    %760 = vmatprep.subr.mxu0 0.0
    %761 = vmatpush1.msra.mxu0 0.0
    %762 = vmatprep.subr.mxu0 0.0
    %763 = vmatpush1.msra.mxu0 0.0
    %764 = vmatprep.subr.mxu0 0.0
    %765 = vmatpush1.msra.mxu0 0.0
    %766 = vmatprep.subr.mxu0 0.0
    %767 = vmatpush1.msra.mxu0 0.0
    %768 = vmatprep.subr.mxu0 0.0
    %769 = vmatpush1.msra.mxu0 0.0
    %770 = vmatprep.subr.mxu0 0.0
    %771 = vmatpush1.msra.mxu0 0.0
    %772 = vmatprep.subr.mxu0 0.0
    %773 = vmatpush1.msra.mxu0 0.0
    %774 = vmatprep.subr.mxu0 0.0
    %775 = vmatpush1.msra.mxu0 0.0
    %776 = vmatprep.subr.mxu0 0.0
    %777 = vmatpush1.msra.mxu0 0.0
    %778 = vmatprep.subr.mxu0 0.0
    %779 = vmatpush1.msra.mxu0 0.0
    %780 = vmatprep.subr.mxu0 0.0
    %781 = vmatpush1.msra.mxu0 0.0
    %782 = vmatprep.subr.mxu0 0.0
    %783 = vmatpush1.msra.mxu0 0.0
    %784 = vmatprep.subr.mxu0 0.0
    %785 = vmatpush1.msra.mxu0 0.0
    %786 = vmatprep.subr.mxu0 0.0
    %787 = vmatpush1.msra.mxu0 0.0
    %788 = vmatprep.subr.mxu0 0.0
    %789 = vmatpush1.msra.mxu0 0.0
    %790 = vmatprep.subr.mxu0 0.0
    %791 = vmatpush1.msra.mxu0 0.0
    %792 = vmatprep.subr.mxu0 0.0
    %793 = vmatpush1.msra.mxu0 0.0
    %794 = vmatprep.subr.mxu0 0.0
    %795 = vmatpush1.msra.mxu0 0.0
    %796 = vmatprep.subr.mxu0 0.0
    %797 = vmatpush1.msra.mxu0 0.0
    %798 = vmatprep.subr.mxu0 0.0
    %799 = vmatpush1.msra.mxu0 0.0
    %800 = vmatprep.subr.mxu0 0.0
    %801 = vmatpush1.msra.mxu0 0.0
    %802 = vmatprep.subr.mxu0 0.0
    %803 = vmatpush1.msra.mxu0 0.0
    %804 = vmatprep.subr.mxu0 0.0
    %805 = vmatpush1.msra.mxu0 0.0
    %806 = vmatprep.subr.mxu0 0.0
    %807 = vmatpush1.msra.mxu0 0.0
    %808 = vmatprep.mubr.f32.mxu0 0.0
    %809 = vmatmul.mubr.f32.gmra.mrb[0].mxu0 %v738
    %v810 = vpop.f32.mrb[0].mxu0
    %v811 = vadd.f32 %v736, %v810
    %v812 = vpop.f32.mrb[0].mxu0
    %813 = vmatprep.mubr.f32.mxu0 0.0
    %814 = vmatmul.mubr.f32.gmra.mrb[0].mxu0 %v740
    %v815 = vpop.f32.mrb[0].mxu0
    %v816 = vadd.f32 %v736, %v815
    %v817 = vpop.f32.mrb[0].mxu0
    %818 = vmatprep.mubr.f32.mxu0 0.0
    %819 = vmatmul.mubr.f32.gmra.mrb[0].mxu0 %v742
    %v820 = vpop.f32.mrb[0].mxu0
    %v821 = vadd.f32 %v736, %v820
    %v822 = vpop.f32.mrb[0].mxu0
    %823 = vdwg.mxu0
    %v824 = vmul.f32 %v811, 0.5
    %v825 = vmul.f32 %v816, 0.5
    %v826 = vmul.f32 %v821, 0.5
    %v827 = vadd.f32 %v625, %v824
    %v828 = vadd.f32 %v630, %v825
    %v829 = vadd.f32 %v635, %v826
    %v830 = vld [vmem:[%s3] sm:$0xff]
    %v831 = vlaneseq
    %v832 = vand.u32 %v831, 127
    %833 = vset.pattern.permute.xlu0 0
    %834 = vperm.xlu0 %833, %v830
    %v835 = vpop.permute.xlu0 %834
    %vm836 = vcmp.eq.s32.totalorder %v832, %v835
    %v837 = vsel %vm836, 1, 0
    %v838 = vcvt.s32.f32 %v837
    %v840 = vsel %vm551, %v838, 0
    %842 = vmatprep.subr.mxu0 0.0
    %843 = vmatpush1.msra.mxu0 %v827
    %844 = vmatprep.subr.mxu0 0.0
    %845 = vmatpush1.msra.mxu0 %v828
    %846 = vmatprep.subr.mxu0 0.0
    %847 = vmatpush1.msra.mxu0 %v829
    %848 = vmatprep.subr.mxu0 0.0
    %849 = vmatpush1.msra.mxu0 0.0
    %850 = vmatprep.subr.mxu0 0.0
    %851 = vmatpush1.msra.mxu0 0.0
    %852 = vmatprep.subr.mxu0 0.0
    %853 = vmatpush1.msra.mxu0 0.0
    %854 = vmatprep.subr.mxu0 0.0
    %855 = vmatpush1.msra.mxu0 0.0
    %856 = vmatprep.subr.mxu0 0.0
    %857 = vmatpush1.msra.mxu0 0.0
    %858 = vmatprep.subr.mxu0 0.0
    %859 = vmatpush1.msra.mxu0 0.0
    %860 = vmatprep.subr.mxu0 0.0
    %861 = vmatpush1.msra.mxu0 0.0
    %862 = vmatprep.subr.mxu0 0.0
    %863 = vmatpush1.msra.mxu0 0.0
    %864 = vmatprep.subr.mxu0 0.0
    %865 = vmatpush1.msra.mxu0 0.0
    %866 = vmatprep.subr.mxu0 0.0
    %867 = vmatpush1.msra.mxu0 0.0
    %868 = vmatprep.subr.mxu0 0.0
    %869 = vmatpush1.msra.mxu0 0.0
    %870 = vmatprep.subr.mxu0 0.0
    %871 = vmatpush1.msra.mxu0 0.0
    %872 = vmatprep.subr.mxu0 0.0
    %873 = vmatpush1.msra.mxu0 0.0
    %874 = vmatprep.subr.mxu0 0.0
    %875 = vmatpush1.msra.mxu0 0.0
    %876 = vmatprep.subr.mxu0 0.0
    %877 = vmatpush1.msra.mxu0 0.0
    %878 = vmatprep.subr.mxu0 0.0
    %879 = vmatpush1.msra.mxu0 0.0
    %880 = vmatprep.subr.mxu0 0.0
    %881 = vmatpush1.msra.mxu0 0.0
    %882 = vmatprep.subr.mxu0 0.0
    %883 = vmatpush1.msra.mxu0 0.0
    %884 = vmatprep.subr.mxu0 0.0
    %885 = vmatpush1.msra.mxu0 0.0
    %886 = vmatprep.subr.mxu0 0.0
    %887 = vmatpush1.msra.mxu0 0.0
    %888 = vmatprep.subr.mxu0 0.0
    %889 = vmatpush1.msra.mxu0 0.0
    %890 = vmatprep.subr.mxu0 0.0
    %891 = vmatpush1.msra.mxu0 0.0
    %892 = vmatprep.subr.mxu0 0.0
    %893 = vmatpush1.msra.mxu0 0.0
    %894 = vmatprep.subr.mxu0 0.0
    %895 = vmatpush1.msra.mxu0 0.0
    %896 = vmatprep.subr.mxu0 0.0
    %897 = vmatpush1.msra.mxu0 0.0
    %898 = vmatprep.subr.mxu0 0.0
    %899 = vmatpush1.msra.mxu0 0.0
    %900 = vmatprep.subr.mxu0 0.0
    %901 = vmatpush1.msra.mxu0 0.0
    %902 = vmatprep.subr.mxu0 0.0
    %903 = vmatpush1.msra.mxu0 0.0
    %904 = vmatprep.subr.mxu0 0.0
    %905 = vmatpush1.msra.mxu0 0.0
    %906 = vmatprep.mubr.f32.mxu0 0.0
    %907 = vmatmul.mubr.f32.gmra.mrb[0].mxu0 %v840
    %v908 = vpop.f32.mrb[0].mxu0
    %v909 = vadd.f32 0.0, %v908
    %v910 = vpop.f32.mrb[0].mxu0
    %911 = vdwg.mxu0
    %v912 = vmax.f32 %v909, 0.0
    %v913 = vld [vmem:[%s12] sm:$0xff]
    %v914 = vld [vmem:[%s12 + $0x8] sm:$0xf]
    %v915 = vld [vmem:[%s13] sm:$0x1]
    %v917 = vlaneseq
    %v918 = vshrl.u32 %v917, 7
    %v919 = vsub.s32 0, %v918
    %v920 = vrot.slane %v915, %v919
    %vm922 = vcmask 97280
    %v924 = vsel %vm922, %v912, 0
    %vm926 = vcmask 1043456
    %v928 = vsel %vm926, %v914, 0
    %930 = vmatprep.subr.mxu0 0.0
    %931 = vmatpush1.msra.mxu0 %v913
    %932 = vmatprep.subr.mxu0 0.0
    %933 = vmatpush1.msra.mxu0 %v928
    %934 = vmatprep.subr.mxu0 0.0
    %935 = vmatpush1.msra.mxu0 0.0
    %936 = vmatprep.subr.mxu0 0.0
    %937 = vmatpush1.msra.mxu0 0.0
    %938 = vmatprep.subr.mxu0 0.0
    %939 = vmatpush1.msra.mxu0 0.0
    %940 = vmatprep.subr.mxu0 0.0
    %941 = vmatpush1.msra.mxu0 0.0
    %942 = vmatprep.subr.mxu0 0.0
    %943 = vmatpush1.msra.mxu0 0.0
    %944 = vmatprep.subr.mxu0 0.0
    %945 = vmatpush1.msra.mxu0 0.0
    %946 = vmatprep.subr.mxu0 0.0
    %947 = vmatpush1.msra.mxu0 0.0
    %948 = vmatprep.subr.mxu0 0.0
    %949 = vmatpush1.msra.mxu0 0.0
    %950 = vmatprep.subr.mxu0 0.0
    %951 = vmatpush1.msra.mxu0 0.0
    %952 = vmatprep.subr.mxu0 0.0
    %953 = vmatpush1.msra.mxu0 0.0
    %954 = vmatprep.subr.mxu0 0.0
    %955 = vmatpush1.msra.mxu0 0.0
    %956 = vmatprep.subr.mxu0 0.0
    %957 = vmatpush1.msra.mxu0 0.0
    %958 = vmatprep.subr.mxu0 0.0
    %959 = vmatpush1.msra.mxu0 0.0
    %960 = vmatprep.subr.mxu0 0.0
    %961 = vmatpush1.msra.mxu0 0.0
    %962 = vmatprep.subr.mxu0 0.0
    %963 = vmatpush1.msra.mxu0 0.0
    %964 = vmatprep.subr.mxu0 0.0
    %965 = vmatpush1.msra.mxu0 0.0
    %966 = vmatprep.subr.mxu0 0.0
    %967 = vmatpush1.msra.mxu0 0.0
    %968 = vmatprep.subr.mxu0 0.0
    %969 = vmatpush1.msra.mxu0 0.0
    %970 = vmatprep.subr.mxu0 0.0
    %971 = vmatpush1.msra.mxu0 0.0
    %972 = vmatprep.subr.mxu0 0.0
    %973 = vmatpush1.msra.mxu0 0.0
    %974 = vmatprep.subr.mxu0 0.0
    %975 = vmatpush1.msra.mxu0 0.0
    %976 = vmatprep.subr.mxu0 0.0
    %977 = vmatpush1.msra.mxu0 0.0
    %978 = vmatprep.subr.mxu0 0.0
    %979 = vmatpush1.msra.mxu0 0.0
    %980 = vmatprep.subr.mxu0 0.0
    %981 = vmatpush1.msra.mxu0 0.0
    %982 = vmatprep.subr.mxu0 0.0
    %983 = vmatpush1.msra.mxu0 0.0
    %984 = vmatprep.subr.mxu0 0.0
    %985 = vmatpush1.msra.mxu0 0.0
    %986 = vmatprep.subr.mxu0 0.0
    %987 = vmatpush1.msra.mxu0 0.0
    %988 = vmatprep.subr.mxu0 0.0
    %989 = vmatpush1.msra.mxu0 0.0
    %990 = vmatprep.subr.mxu0 0.0
    %991 = vmatpush1.msra.mxu0 0.0
    %992 = vmatprep.subr.mxu0 0.0
    %993 = vmatpush1.msra.mxu0 0.0
    %994 = vmatprep.mubr.f32.mxu0 0.0
    %995 = vmatmul.mubr.f32.gmra.mrb[0].mxu0 %v924
    %v996 = vpop.f32.mrb[0].mxu0
    %v997 = vadd.f32 %v920, %v996
    %v998 = vpop.f32.mrb[0].mxu0
    %999 = vdwg.mxu0
    %1000 = vst.msk [vmem:[#allocation2] sm:$0xff] %vm454, %v252
    %1001 = vst.msk [vmem:[#allocation2 + $0x8] sm:$0xff] %vm454, %v253
    %1002 = vst.msk [vmem:[#allocation2 + $0x10] sm:$0xff] %vm454, %v254
    %v1003 = vxor.u32 %v997, 2147483648
    %v1004 = vmul.f32 %v1003, 1.442695
    %v1005 = vpow.pop %v1004
    %v1006 = vadd.f32 %v1005, 1.0
    %v1007 = vrcp.pop %v1006
    %v1008 = vmul.f32 1.0, %v1007
    %vm1009 = vcmask 31744
    %1010 = vst.msk [vmem:[%s15] sm:$0xff] %vm1009, %v1008
    // Predicated region
    $region58: #{tpu_custom_call.1} parent=1 // pred_check
      _
    $region59: #{tpu_custom_call.1} parent=1 // pred_check_branch
      %1012 = sbr.rel (0) target = $region61
    $region60: #{tpu_custom_call.1} parent=1 // pred_region
      %s1014 = ssub.s32 384, 384
      %1015 = vsyncadd [#allocation3], %s1014
      %s1016 = sshll.u32 [#allocation2], 4
      %s1017 = int_to_ptr.vmem [resolvable:$true] %s1016
      %1022 = dma.vmem_to_hbm [thread:$0]  %s1017, 384, %s14, [#allocation3], 128, 128, 8
    $region61: #{tpu_custom_call.1} parent=1 // pred_fallthru
      _
    // Predicated region
    $region62: #{tpu_custom_call.1} parent=1 // pred_check
      _
    $region63: #{tpu_custom_call.1} parent=1 // pred_check_branch
      %1024 = sbr.rel (0) target = $region65
    $region64: #{tpu_custom_call.1} parent=1 // pred_region
      _
    $region65: #{tpu_custom_call.1} parent=1 // pred_fallthru
      _
    // Predicated region
    $region66: #{tpu_custom_call.1} parent=1 // pred_check
      _
    $region67: #{tpu_custom_call.1} parent=1 // pred_check_branch
      %1026 = sbr.rel (0) target = $region69
    $region68: #{tpu_custom_call.1} parent=1 // pred_region
      %1027 = dma.done [#allocation3], 384
    $region69: #{tpu_custom_call.1} parent=1 // pred_fallthru
      _
    // Predicated region
    $region70: #{tpu_custom_call.1} parent=1 // pred_check
      _
    $region71: #{tpu_custom_call.1} parent=1 // pred_check_branch
      %1029 = sbr.rel (0) target = $region73
    $region72: #{tpu_custom_call.1} parent=1 // pred_region
      _
    $region73: #{tpu_custom_call.1} parent=1 // pred_fallthru
      _
    %1030 = vsyncpa [#allocation3], 1

</llo_original>
